<compile_context>
chip_gen: v6e
topology: v6e:2x2x1
jax: 0.10.0
libtpu: 0.0.40
codegen_flags: <defaults>
</compile_context>

<pallas_src>
import jax
import jax.numpy as jnp
from jax.experimental import pallas as pl
from jax.experimental.pallas import tpu as pltpu


def categorical_head_kernel(x_ref, w_ref, b_ref, logp_ref, probs_ref):
    # x_ref: [TB, K]   w_ref: [K, Np] (pre-transposed, lane-dense)
    # b_ref: [1, Np]   logp_ref/probs_ref: [TB, Np]
    y = jnp.dot(x_ref[...], w_ref[...], preferred_element_type=jnp.float32)
    y = y + b_ref[...]                       # [1, Np] broadcasts over batch tile

    # Numerically stable log-softmax / softmax over the lane (class) axis.
    # Pad classes carry bias -1e30 -> exp underflows to exactly 0, so both the
    # max and the sum are identical to the unpadded computation.
    m = jnp.max(y, axis=-1, keepdims=True)
    z = y - m
    s = jnp.sum(jnp.exp(z), axis=-1, keepdims=True)

    log_probs = z - jnp.log(s)
    probs = jnp.exp(log_probs)               # exact consistency with log_probs (EUP)

    logp_ref[...] = log_probs.astype(logp_ref.dtype)
    probs_ref[...] = probs.astype(probs_ref.dtype)


def _batch_tile(batch, num_inputs, n_padded, *, cap=8192, vmem_budget_bytes=16 << 20):
    """Pick the batch tile.

    - Largest multiple of 8 that fits a conservative double-buffered VMEM
      budget and is <= cap.
    - Does NOT need to divide the batch: grid = cdiv(B, tb) and the padded
      rows of the last block only ever see masked writes.
    - When batch >= 16, cap the tile so the grid has >= 2 steps (v7x megacore
      sharding via dimension_semantics=("parallel",)).
    """
    if batch <= 8:
        return batch  # single full-extent block (always legal)
    # per-row f32 bytes across the double-buffered pipelined blocks: x + 2 outputs
    bytes_per_row = 2 * 4 * (num_inputs + 2 * n_padded)
    cap = min(cap, max(8, (vmem_budget_bytes // bytes_per_row // 8) * 8))
    if batch >= 16:
        cap = min(cap, max(8, ((batch // 2) // 8) * 8))
    return max(8, min(cap, (batch // 8) * 8))


def categorical_head(x, weight, bias):
    """x: [B, num_inputs]; weight: [num_outputs, num_inputs] (PyTorch layout);
    bias: [num_outputs]. Returns (log_probs, probs), each [B, num_outputs]."""
    B, num_inputs = x.shape
    num_outputs = weight.shape[0]

    # Lane-dense class axis: pad to a multiple of 128.
    n_pad = ((num_outputs + 127) // 128) * 128

    # One-time (tiny) XLA-side transpose + pad of the weight / bias.
    # Pad classes: zero weight columns, -1e30 bias -> zero probability.
    w_t = jnp.zeros((num_inputs, n_pad), jnp.float32).at[:, :num_outputs].set(
        weight.astype(jnp.float32).T)
    b_p = jnp.full((1, n_pad), -1e30, jnp.float32).at[0, :num_outputs].set(
        bias.astype(jnp.float32))

    tb = _batch_tile(B, num_inputs, n_pad)
    grid = (pl.cdiv(B, tb),)

    logp, probs = pl.pallas_call(
        categorical_head_kernel,
        out_shape=(jax.ShapeDtypeStruct((B, n_pad), jnp.float32),
                   jax.ShapeDtypeStruct((B, n_pad), jnp.float32)),
        grid=grid,
        in_specs=[
            # batch-tiled activations
            pl.BlockSpec((tb, num_inputs), lambda i: (i, 0)),
            # weight / bias: same block every step -> resident across the grid
            pl.BlockSpec((num_inputs, n_pad), lambda i: (0, 0)),
            pl.BlockSpec((1, n_pad), lambda i: (0, 0)),
        ],
        out_specs=(
            pl.BlockSpec((tb, n_pad), lambda i: (i, 0)),
            pl.BlockSpec((tb, n_pad), lambda i: (i, 0)),
        ),
        compiler_params=pltpu.CompilerParams(
            dimension_semantics=("parallel",)),
    )(x.astype(jnp.float32), w_t, b_p)

    # Slice the real classes back out (no-op if num_outputs is already 128-aligned).
    return logp[:, :num_outputs], probs[:, :num_outputs]


if __name__ == "__main__":
    key = jax.random.PRNGKey(0)
    kx, kw = jax.random.split(key)

    batch = 8
    num_inputs = 32
    num_outputs = 16

    # Deterministic parameter init matching the module's __init__:
    #   weight: orthogonal init with gain=0.01, shape [num_outputs, num_inputs]
    #   bias:   zeros
    weight = jax.nn.initializers.orthogonal(scale=0.01)(
        kw, (num_outputs, num_inputs), jnp.float32)
    bias = jnp.zeros((num_outputs,), jnp.float32)

    x = jax.random.normal(kx, (batch, num_inputs), jnp.float32)

    log_probs, probs = categorical_head(x, weight, bias)
    jax.block_until_ready((log_probs, probs))

    # Reference check in plain JAX
    y_ref = x @ weight.T + bias
    logp_ref = jax.nn.log_softmax(y_ref, axis=-1)
    probs_ref = jax.nn.softmax(y_ref, axis=-1)
    assert jnp.allclose(log_probs, logp_ref, atol=1e-5, rtol=1e-5)
    assert jnp.allclose(probs, probs_ref, atol=1e-5, rtol=1e-5)
    assert jnp.allclose(jnp.sum(probs, axis=-1), 1.0, atol=1e-4)
    # exact consistency between the two distribution parameterizations
    assert jnp.allclose(jnp.exp(log_probs), probs, atol=1e-6)

    # TODO(synk): FixedCategorical.sample()/log_prob(actions)/mode() are
    # distribution methods on top of these parameters; mode/log_prob are cheap
    # argmax/gather on the returned arrays and sampling needs an RNG draw,
    # so they are left to the caller rather than faked in-kernel.

    print("KERNEL_OK")
</pallas_src>

<mosaic_0001>
module attributes {stable_mosaic.version = 11 : i64} {
  func.func @categorical_head_kernel(%arg0: i32, %arg1: memref<8x32xf32, #tpu.memory_space<vmem>>, %arg2: memref<32x128xf32, #tpu.memory_space<vmem>>, %arg3: memref<1x128xf32, #tpu.memory_space<vmem>>, %arg4: memref<8x128xf32, #tpu.memory_space<vmem>>, %arg5: memref<8x128xf32, #tpu.memory_space<vmem>>) attributes {dimension_semantics = [#tpu.dimension_semantics<parallel>], iteration_bounds = array<i64: 1>, scalar_prefetch = 0 : i64, scratch_operands = 0 : i64, tpu.core_type = #tpu.core_type<tc>, window_params = [{transform_indices = @transform_0, window_bounds = array<i64: 8, 32>}, {pipeline_mode = #tpu.pipeline_mode<synchronous>, transform_indices = @transform_1, window_bounds = array<i64: 32, 128>}, {pipeline_mode = #tpu.pipeline_mode<synchronous>, transform_indices = @transform_2, window_bounds = array<i64: 1, 128>}, {transform_indices = @transform_3, window_bounds = array<i64: 8, 128>}, {transform_indices = @transform_4, window_bounds = array<i64: 8, 128>}]} {
    %c0 = arith.constant 0 : index
    %c0_0 = arith.constant 0 : index
    %0 = vector.load %arg1[%c0, %c0_0] : memref<8x32xf32, #tpu.memory_space<vmem>>, vector<8x32xf32>
    %c0_1 = arith.constant 0 : index
    %c0_2 = arith.constant 0 : index
    %1 = vector.load %arg2[%c0_1, %c0_2] : memref<32x128xf32, #tpu.memory_space<vmem>>, vector<32x128xf32>
    %cst = arith.constant dense<0.000000e+00> : vector<8x128xf32>
    %2 = tpu.matmul %0, %1, %cst {dimension_numbers = #tpu.dot_dimension_numbers<[1], [0], [0], [1], [0, 0, 1, 1], [], []>} : vector<8x32xf32>, vector<32x128xf32>, vector<8x128xf32> -> vector<8x128xf32>
    %c0_3 = arith.constant 0 : index
    %c0_4 = arith.constant 0 : index
    %3 = vector.load %arg3[%c0_3, %c0_4] : memref<1x128xf32, #tpu.memory_space<vmem>>, vector<1x128xf32>
    %4 = vector.broadcast %3 : vector<1x128xf32> to vector<8x128xf32>
    %5 = arith.addf %2, %4 : vector<8x128xf32>
    %cst_5 = arith.constant dense<0xFF800000> : vector<8xf32>
    %6 = vector.multi_reduction <maximumf>, %5, %cst_5 [1] : vector<8x128xf32> to vector<8xf32>
    %7 = vector.shape_cast %6 : vector<8xf32> to vector<8x1xf32>
    %8 = vector.broadcast %7 : vector<8x1xf32> to vector<8x128xf32>
    %9 = arith.subf %5, %8 : vector<8x128xf32>
    %10 = math.exp %9 : vector<8x128xf32>
    %cst_6 = arith.constant dense<0.000000e+00> : vector<8xf32>
    %11 = vector.multi_reduction <add>, %10, %cst_6 [1] : vector<8x128xf32> to vector<8xf32>
    %12 = vector.shape_cast %11 : vector<8xf32> to vector<8x1xf32>
    %13 = math.log %12 : vector<8x1xf32>
    %14 = vector.broadcast %13 : vector<8x1xf32> to vector<8x128xf32>
    %15 = arith.subf %9, %14 : vector<8x128xf32>
    %16 = math.exp %15 : vector<8x128xf32>
    %c0_7 = arith.constant 0 : index
    %c0_8 = arith.constant 0 : index
    %17 = vector.load %arg4[%c0_7, %c0_8] : memref<8x128xf32, #tpu.memory_space<vmem>>, vector<8x128xf32>
    tpu.vector_store %arg4[%c0_7, %c0_8], %15 {strides = array<i32>} : memref<8x128xf32, #tpu.memory_space<vmem>>, vector<8x128xf32>,
    %c0_9 = arith.constant 0 : index
    %c0_10 = arith.constant 0 : index
    %18 = vector.load %arg5[%c0_9, %c0_10] : memref<8x128xf32, #tpu.memory_space<vmem>>, vector<8x128xf32>
    tpu.vector_store %arg5[%c0_9, %c0_10], %16 {strides = array<i32>} : memref<8x128xf32, #tpu.memory_space<vmem>>, vector<8x128xf32>,
    return
  }
  func.func @transform_0(%arg0: i32) -> (i32, i32) {
    %c0_i32 = arith.constant 0 : i32
    %c0_i32_0 = arith.constant 0 : i32
    return %arg0, %c0_i32 : i32, i32
  }
  func.func @transform_1(%arg0: i32) -> (i32, i32) {
    %c0_i32 = arith.constant 0 : i32
    %c0_i32_0 = arith.constant 0 : i32
    %c0_i32_1 = arith.constant 0 : i32
    return %c0_i32, %c0_i32_0 : i32, i32
  }
  func.func @transform_2(%arg0: i32) -> (i32, i32) {
    %c0_i32 = arith.constant 0 : i32
    %c0_i32_0 = arith.constant 0 : i32
    %c0_i32_1 = arith.constant 0 : i32
    return %c0_i32, %c0_i32_0 : i32, i32
  }
  func.func @transform_3(%arg0: i32) -> (i32, i32) {
    %c0_i32 = arith.constant 0 : i32
    %c0_i32_0 = arith.constant 0 : i32
    return %arg0, %c0_i32 : i32, i32
  }
  func.func @transform_4(%arg0: i32) -> (i32, i32) {
    %c0_i32 = arith.constant 0 : i32
    %c0_i32_0 = arith.constant 0 : i32
    return %arg0, %c0_i32 : i32, i32
  }
}

</mosaic_0001>

<llo_original>
// kernel: tpu_custom_call.1
$region0: #{tpu_custom_call.1}
  #allocation0 [shape = 'u32[]', space=smem, size = 0x4, offset = 0x4, fixed_abs, tag = 'smem constant byte address 0x4 - core index']
  #allocation1 [shape = 'u32[144,128]{1,0:T(1,128)}', space=vmem, size = 0x12000, scoped, tag = 'internal scratch']
  %s0 = inlined_call_operand.hbm [shape: f32[8,32], index: 0, kind: input, shape index: {}]
  %s1 = inlined_call_operand.hbm [shape: f32[32,128], index: 1, kind: input, shape index: {}]
  %s2 = inlined_call_operand.vmem [shape: f32[1,128], index: 2, kind: input, shape index: {}]
  %s3 = inlined_call_operand.hbm [shape: f32[8,128], index: 3, kind: output, shape index: {0}]
  %s4 = inlined_call_operand.hbm [shape: f32[8,128], index: 4, kind: output, shape index: {1}]
  %5 = xla_tuple %s3, %s4
  %s6 = sld [smem:[#allocation0]]
  $region38: #{tpu_custom_call.1} parent=0
    _
  %s8 = ssub.s32 1, %s6
  %s9 = scalar_select 0, %s8, %s6
  $region1: #{tpu_custom_call.1} parent=0
    #allocation2 [shape = 'u8[4096]{0}', space=vmem, size = 0x1000, scoped, tag = 'input window, operand 0, single buffered']
    #allocation3 [shape = 's32[1]{0}', space=sflag, size = 0x4, scoped, tag = 'scoped memory for tpu_custom_call.1']
    #allocation4 [shape = 's32[1]{0}', space=sflag, size = 0x4, scoped, tag = 'scoped memory for tpu_custom_call.1']
    #allocation5 [shape = 'u8[16384]{0}', space=vmem, size = 0x4000, scoped, tag = 'input window, operand 1, single buffered']
    #allocation6 [shape = 's32[1]{0}', space=sflag, size = 0x4, scoped, tag = 'scoped memory for tpu_custom_call.1']
    #allocation7 [shape = 'u8[4096]{0}', space=vmem, size = 0x1000, scoped, tag = 'output window, operand 0, single buffered']
    #allocation8 [shape = 'u8[4096]{0}', space=vmem, size = 0x1000, scoped, tag = 'output window, operand 1, single buffered']
    #allocation9 [shape = 's32[1]{0}', space=sflag, size = 0x4, scoped, tag = 'scoped memory for tpu_custom_call.1']
    %10 = vsyncpa [#allocation3], 0
    %11 = vsyncpa [#allocation6], 0
    %12 = vsyncpa [#allocation4], 0
    %13 = vsyncpa [#allocation9], 0
    // Predicated region
    $region2: #{tpu_custom_call.1} parent=1 // pred_check
      _
    $region3: #{tpu_custom_call.1} parent=1 // pred_check_branch
      %15 = sbr.rel (0) target = $region5
    $region4: #{tpu_custom_call.1} parent=1 // pred_region
      %s17 = ssub.s32 128, 128
      %18 = vsyncadd [#allocation3], %s17
      %s20 = sshll.u32 [#allocation2], 4
      %s21 = int_to_ptr.vmem [resolvable:$true] %s20
      %23 = dma.hbm_to_vmem [thread:$0]  %s0, 128, %s21, [#allocation3]
    $region5: #{tpu_custom_call.1} parent=1 // pred_fallthru
      _
    // Predicated region
    $region6: #{tpu_custom_call.1} parent=1 // pred_check
      _
    $region7: #{tpu_custom_call.1} parent=1 // pred_check_branch
      %25 = sbr.rel (0) target = $region9
    $region8: #{tpu_custom_call.1} parent=1 // pred_region
      %s27 = ssub.s32 512, 512
      %28 = vsyncadd [#allocation6], %s27
      %s29 = sshll.u32 [#allocation5], 4
      %s30 = int_to_ptr.vmem [resolvable:$true] %s29
      %35 = dma.hbm_to_vmem [thread:$0]  %s1, 512, %s30, [#allocation6], 128, 128, 8
    $region9: #{tpu_custom_call.1} parent=1 // pred_fallthru
      _
    // Predicated region
    $region10: #{tpu_custom_call.1} parent=1 // pred_check
      _
    $region11: #{tpu_custom_call.1} parent=1 // pred_check_branch
      %37 = sbr.rel (0) target = $region13
    $region12: #{tpu_custom_call.1} parent=1 // pred_region
      _
    $region13: #{tpu_custom_call.1} parent=1 // pred_fallthru
      _
    // Predicated region
    $region14: #{tpu_custom_call.1} parent=1 // pred_check
      _
    $region15: #{tpu_custom_call.1} parent=1 // pred_check_branch
      %39 = sbr.rel (0) target = $region17
    $region16: #{tpu_custom_call.1} parent=1 // pred_region
      %40 = dma.done [#allocation3], 128
    $region17: #{tpu_custom_call.1} parent=1 // pred_fallthru
      _
    // Predicated region
    $region18: #{tpu_custom_call.1} parent=1 // pred_check
      _
    $region19: #{tpu_custom_call.1} parent=1 // pred_check_branch
      %42 = sbr.rel (0) target = $region21
    $region20: #{tpu_custom_call.1} parent=1 // pred_region
      %43 = dma.done [#allocation6], 512
    $region21: #{tpu_custom_call.1} parent=1 // pred_fallthru
      _
    %v44 = vld [vmem:[#allocation2] sm:$0xff]
    %v45 = vld [vmem:[#allocation5] sm:$0xff]
    %v46 = vld [vmem:[#allocation5 + $0x8] sm:$0xff]
    %v47 = vld [vmem:[#allocation5 + $0x10] sm:$0xff]
    %v48 = vld [vmem:[#allocation5 + $0x18] sm:$0xff]
    %v49 = vld [vmem:[%s2] sm:$0x1]
    %v51 = vlaneseq
    %v52 = vshrl.u32 %v51, 7
    %v53 = vsub.s32 0, %v52
    %v54 = vrot.slane %v49, %v53
    %vm56 = vcmask 261120
    %v58 = vsel %vm56, %v44, 0
    %60 = vmatprep.subr.mxu0 0.0
    %61 = vmatpush1.msra.mxu0 0.0
    %62 = vmatprep.subr.mxu0 0.0
    %63 = vmatpush1.msra.mxu0 0.0
    %64 = vmatprep.subr.mxu0 0.0
    %65 = vmatpush1.msra.mxu0 0.0
    %66 = vmatprep.subr.mxu0 0.0
    %67 = vmatpush1.msra.mxu0 0.0
    %68 = vmatprep.subr.mxu0 0.0
    %69 = vmatpush1.msra.mxu0 0.0
    %70 = vmatprep.subr.mxu0 0.0
    %71 = vmatpush1.msra.mxu0 0.0
    %72 = vmatprep.subr.mxu0 0.0
    %73 = vmatpush1.msra.mxu0 0.0
    %74 = vmatprep.subr.mxu0 0.0
    %75 = vmatpush1.msra.mxu0 0.0
    %76 = vmatprep.subr.mxu0 0.0
    %77 = vmatpush1.msra.mxu0 0.0
    %78 = vmatprep.subr.mxu0 0.0
    %79 = vmatpush1.msra.mxu0 0.0
    %80 = vmatprep.subr.mxu0 0.0
    %81 = vmatpush1.msra.mxu0 0.0
    %82 = vmatprep.subr.mxu0 0.0
    %83 = vmatpush1.msra.mxu0 0.0
    %84 = vmatprep.subr.mxu0 0.0
    %85 = vmatpush1.msra.mxu0 %v48
    %86 = vmatprep.subr.mxu0 0.0
    %87 = vmatpush1.msra.mxu0 %v47
    %88 = vmatprep.subr.mxu0 0.0
    %89 = vmatpush1.msra.mxu0 %v46
    %90 = vmatprep.subr.mxu0 0.0
    %91 = vmatpush1.msra.mxu0 %v45
    %92 = vmatprep.subr.mxu0 0.0
    %93 = vmatpush2.msra.mxu0 0.0
    %94 = vmatprep.subr.mxu0 0.0
    %95 = vmatpush2.msra.mxu0 0.0
    %96 = vmatprep.subr.mxu0 0.0
    %97 = vmatpush2.msra.mxu0 0.0
    %98 = vmatprep.subr.mxu0 0.0
    %99 = vmatpush2.msra.mxu0 0.0
    %100 = vmatprep.subr.mxu0 0.0
    %101 = vmatpush2.msra.mxu0 0.0
    %102 = vmatprep.subr.mxu0 0.0
    %103 = vmatpush2.msra.mxu0 0.0
    %104 = vmatprep.subr.mxu0 0.0
    %105 = vmatpush2.msra.mxu0 0.0
    %106 = vmatprep.subr.mxu0 0.0
    %107 = vmatpush2.msra.mxu0 0.0
    %108 = vmatprep.subr.mxu0 0.0
    %109 = vmatpush2.msra.mxu0 0.0
    %110 = vmatprep.subr.mxu0 0.0
    %111 = vmatpush2.msra.mxu0 0.0
    %112 = vmatprep.subr.mxu0 0.0
    %113 = vmatpush2.msra.mxu0 0.0
    %114 = vmatprep.subr.mxu0 0.0
    %115 = vmatpush2.msra.mxu0 0.0
    %116 = vmatprep.subr.mxu0 0.0
    %117 = vmatpush2.msra.mxu0 0.0
    %118 = vmatprep.subr.mxu0 0.0
    %119 = vmatpush2.msra.mxu0 0.0
    %120 = vmatprep.subr.mxu0 0.0
    %121 = vmatpush2.msra.mxu0 0.0
    %122 = vmatprep.subr.mxu0 0.0
    %123 = vmatpush2.msra.mxu0 0.0
    %124 = vmatprep.mubr.f32.mxu0 0.0
    %125 = vmatmul.mubr.f32.gmra.mxu0 %v58
    %v126 = vpop.f32.mrf.mxu0
    %v127 = vadd.f32 %v54, %v126
    %v128 = vpop.f32.mrf.mxu0
    %129 = vdwg.mxu0
    %130 = vmax.xlane.f32.xlu0 %v127
    %v131 = vpop.xlane.xlu0 %130
    %v132 = vsub.f32 %v127, %v131
    %v133 = vmul.f32 %v132, 1.442695
    %v134 = vpow.pop %v133
    %135 = vadd.xlane.f32.xlu0 %v134
    %v136 = vpop.xlane.xlu0 %135
    %v137 = vlog2.pop %v136
    %v138 = vmul.f32 %v137, 0.6931472
    %v139 = vsub.f32 %v132, %v138
    %v140 = vmul.f32 %v139, 1.442695
    %v141 = vpow.pop %v140
    %142 = vst [vmem:[#allocation7] sm:$0xff] %v139
    %143 = vst [vmem:[#allocation8] sm:$0xff] %v141
    // Predicated region
    $region22: #{tpu_custom_call.1} parent=1 // pred_check
      _
    $region23: #{tpu_custom_call.1} parent=1 // pred_check_branch
      %145 = sbr.rel (0) target = $region25
    $region24: #{tpu_custom_call.1} parent=1 // pred_region
      %s147 = ssub.s32 128, 128
      %148 = vsyncadd [#allocation4], %s147
      %s150 = sshll.u32 [#allocation7], 4
      %s151 = int_to_ptr.vmem [resolvable:$true] %s150
      %153 = dma.vmem_to_hbm [thread:$0]  %s151, 128, %s3, [#allocation4]
    $region25: #{tpu_custom_call.1} parent=1 // pred_fallthru
      _
    // Predicated region
    $region26: #{tpu_custom_call.1} parent=1 // pred_check
      _
    $region27: #{tpu_custom_call.1} parent=1 // pred_check_branch
      %155 = sbr.rel (0) target = $region29
    $region28: #{tpu_custom_call.1} parent=1 // pred_region
      %s157 = ssub.s32 128, 128
      %158 = vsyncadd [#allocation9], %s157
      %s160 = sshll.u32 [#allocation8], 4
      %s161 = int_to_ptr.vmem [resolvable:$true] %s160
      %163 = dma.vmem_to_hbm [thread:$0]  %s161, 128, %s4, [#allocation9]
    $region29: #{tpu_custom_call.1} parent=1 // pred_fallthru
      _
    // Predicated region
    $region30: #{tpu_custom_call.1} parent=1 // pred_check
      _
    $region31: #{tpu_custom_call.1} parent=1 // pred_check_branch
      %165 = sbr.rel (0) target = $region33
    $region32: #{tpu_custom_call.1} parent=1 // pred_region
      %166 = dma.done [#allocation4], 128
    $region33: #{tpu_custom_call.1} parent=1 // pred_fallthru
      _
    // Predicated region
    $region34: #{tpu_custom_call.1} parent=1 // pred_check
      _
    $region35: #{tpu_custom_call.1} parent=1 // pred_check_branch
      %168 = sbr.rel (0) target = $region37
    $region36: #{tpu_custom_call.1} parent=1 // pred_region
      %169 = dma.done [#allocation9], 128
    $region37: #{tpu_custom_call.1} parent=1 // pred_fallthru
      _
    %170 = vsyncpa [#allocation3], 1
    %171 = vsyncpa [#allocation6], 1
    %172 = vsyncpa [#allocation4], 1
    %173 = vsyncpa [#allocation9], 1

</llo_original>
